<compile_context>
chip_gen: v5e
topology: v5e:2x2
jax: 0.10.0
libtpu: 0.0.40
codegen_flags: <defaults>
</compile_context>

<pallas_src>
import math

import jax
import jax.numpy as jnp
from jax.experimental import pallas as pl
from jax.experimental.pallas import tpu as pltpu

# ---- small, TPU-friendly shapes implied by the module ----
B = 2        # batch (queries)
S = 16       # sequence length
H = 128      # encoder hidden size
NSEP = 4     # sep indices per query
P = NSEP - 1 # candidate passages per query

LN_EPS_DENSE = 1e-5    # torch.nn.LayerNorm default (self.layer_norm)
LN_EPS_BERT = 1e-12    # BertPredictionHeadTransform LayerNorm eps
NORM_POWER = 2.0       # model_args.norm_power (not NaN -> normalize applied)
NORM_EPS = 1e-12       # F.normalize eps
_INV_SQRT2 = 0.7071067811865476


def _layernorm(x, gamma, beta, eps):
    mu = jnp.mean(x, axis=-1, keepdims=True)
    var = jnp.mean(jnp.square(x - mu), axis=-1, keepdims=True)
    return (x - mu) * jax.lax.rsqrt(var + eps) * gamma + beta


def dense_dqr_kernel(sep_ref,                        # SMEM [B, P+1] int32 (scalar prefetch)
                     hid_ref,                        # VMEM [B, S, H] bf16
                     wf_ref,                         # VMEM [H, 2H] bf16 (dense|transform W^T)
                     bf_ref,                         # VMEM [1, 2H] f32  (dense|transform bias)
                     gd_ref, bed_ref,                # dense layer_norm gamma/beta
                     gt_ref, bet_ref,                # transform LayerNorm gamma/beta
                     wr_ref,                         # VMEM [1, H] reranker.weight
                     br_ref,                         # SMEM [1, 1] reranker.bias
                     dense_out_ref,                  # VMEM [B, H] f32
                     logit_out_ref):                 # VMEM [B, P] f32
    bsz, seq, hdim = hid_ref.shape
    npsg = logit_out_ref.shape[1]
    nrows = bsz + bsz * npsg          # B CLS rows + B*P passage rows (== 8 here)
    ntok = bsz * seq

    # ---- static scaffolding (built once, independent of sep values) ----
    row_i = jax.lax.broadcasted_iota(jnp.int32, (nrows, ntok), 0)
    pos = jax.lax.broadcasted_iota(jnp.int32, (nrows, ntok), 1)   # flat token pos
    # CLS selector rows: row q (< B) picks flat token q*S (hidden[q, 0]).
    mask = jnp.where((row_i < bsz) & (pos == row_i * seq),
                     1.0, jnp.zeros((nrows, ntok), jnp.float32))
    # row->lane one-hot for the score scatter: onehot[q*P+p, p] = 1
    r6 = jax.lax.broadcasted_iota(jnp.int32, (bsz * npsg, npsg), 0)
    c3 = jax.lax.broadcasted_iota(jnp.int32, (bsz * npsg, npsg), 1)
    onehot_rp = jnp.zeros((bsz * npsg, npsg), jnp.float32)
    for q in range(bsz):
        onehot_rp = jnp.where(r6 == c3 + q * npsg, 1.0, onehot_rp)
    # query-block selector: qsel[q, r] = 1 iff q*P <= r < (q+1)*P
    rb = jax.lax.broadcasted_iota(jnp.int32, (bsz, bsz * npsg), 0)
    cb = jax.lax.broadcasted_iota(jnp.int32, (bsz, bsz * npsg), 1)
    qsel = jnp.where((cb >= rb * npsg) & (cb < (rb + 1) * npsg), 1.0, 0.0)
    # validity plane iotas
    q_bp = jax.lax.broadcasted_iota(jnp.int32, (bsz, npsg), 0)
    p_bp = jax.lax.broadcasted_iota(jnp.int32, (bsz, npsg), 1)

    # ---- passage masks from SMEM sep scalars (unrolled: tiny B*P, VPU filler) ----
    valid_bp = jnp.zeros((bsz, npsg), dtype=jnp.bool_)            # torch psgs_mask
    for q in range(bsz):
        valid = None
        for p in range(npsg):
            start = sep_ref[q, p]              # SMEM scalar reads
            end = sep_ref[q, p + 1]
            nonempty = end > start + 1
            # cumulative AND reproduces the PyTorch loop's `break`
            # (passage p valid iff every p' <= p has sep[p'+1] > sep[p'] + 1)
            valid = nonempty if valid is None else jnp.logical_and(valid, nonempty)
            r = bsz + q * npsg + p
            # tokens sep_idx+1 .. next_sep-1 of passage p, in query q's S-range
            sel = ((row_i == r)
                   & (pos > start + q * seq) & (pos < end + q * seq)
                   & valid)
            mask = jnp.where(sel, 1.0, mask)
            valid_bp = valid_bp | ((q_bp == q) & (p_bp == p) & valid)

    # ---- ONE block-diagonal pooling matmul: [B+B*P, B*S] @ [B*S, H] ----
    hid_flat = hid_ref[...].reshape(ntok, hdim)     # leading-dim flatten: layout-preserving
    cnt = jnp.maximum(jnp.sum(mask, axis=-1, keepdims=True), 1.0)   # CLS rows: cnt == 1
    x_all = jnp.dot(mask.astype(hid_flat.dtype), hid_flat,
                    preferred_element_type=jnp.float32) / cnt       # [B+B*P, H] f32
    # NOTE: invalid passages give an all-zero pooled row; the transform LayerNorm
    # then leans on eps (large but finite garbage) and the result is NaN-masked
    # below — do NOT remove the NaN mask.

    # ---- ONE fused [B+B*P, H] x [H, 2H] matmul (fills the 256-lane MXU) ----
    yz = jnp.dot(x_all.astype(wf_ref.dtype), wf_ref[...],
                 preferred_element_type=jnp.float32) + bf_ref[...]  # [B+B*P, 2H] f32
    y = yz[:bsz, :hdim]      # dense path : cls    @ W_dense     + b_dense
    t = yz[bsz:, hdim:]      # psg path   : pooled @ W_transform + b_transform

    # ---- dense path: LayerNorm -> F.normalize(p=2) ----
    y = _layernorm(y, gd_ref[...], bed_ref[...], LN_EPS_DENSE)
    ss = jnp.sum(y * y, axis=-1, keepdims=True)
    # F.normalize: x / max(||x||, eps) == x * rsqrt(max(||x||^2, eps^2))
    dense_out_ref[...] = y * jax.lax.rsqrt(jnp.maximum(ss, NORM_EPS * NORM_EPS))

    # ---- passage scoring: exact GELU -> LayerNorm -> reranker ----
    t = 0.5 * t * (1.0 + jax.lax.erf(t * _INV_SQRT2))              # exact erf-GELU
    t = _layernorm(t, gt_ref[...], bet_ref[...], LN_EPS_BERT)
    s_col = jnp.sum(t * wr_ref[...], axis=-1, keepdims=True)       # [B*P, 1]

    # scatter the [B*P,1] score column into [B,P] without transpose/reshape:
    # lane-spread via the one-hot, then one tiny [B, B*P] x [B*P, P] matmul.
    spread = s_col * onehot_rp                                      # [B*P, P]
    scores = jnp.dot(qsel, spread,
                     preferred_element_type=jnp.float32) + br_ref[0, 0]
    logit_out_ref[...] = jnp.where(valid_bp, scores, jnp.float32(jnp.nan))


def dense_dqr_forward(hidden_vectors, sep_indices, params):
    B_, S_, H_ = hidden_vectors.shape
    P_ = sep_indices.shape[1] - 1

    # if math.isnan(norm_power) the normalize step would be skipped; here
    # NORM_POWER == 2.0 so it is fused inside the kernel.
    assert not math.isnan(NORM_POWER)

    # bf16 inputs halve the un-overlapped front-of-kernel DMA; all post-matmul
    # math stays f32 inside the kernel (preferred_element_type=f32).
    hid_bf16 = hidden_vectors.astype(jnp.bfloat16)
    # pack dense_proj / psg_transform into one [H, 2H] weight + [1, 2H] bias
    # (in production this packing would be done once at load time).
    w_fused = jnp.concatenate([params["w_dense_t"], params["w_transform_t"]],
                              axis=1).astype(jnp.bfloat16)          # [H, 2H]
    b_fused = jnp.concatenate([params["b_dense"], params["b_transform"]],
                              axis=1)                               # [1, 2H]

    grid_spec = pltpu.PrefetchScalarGridSpec(
        num_scalar_prefetch=1,                 # sep_indices -> SMEM
        grid=(1,),
        in_specs=[
            pl.BlockSpec((B_, S_, H_), lambda i, sep: (0, 0, 0)),   # hidden_vectors (bf16)
            pl.BlockSpec((H_, 2 * H_), lambda i, sep: (0, 0)),      # fused W^T (bf16)
            pl.BlockSpec((1, 2 * H_), lambda i, sep: (0, 0)),       # fused bias
            pl.BlockSpec((1, H_), lambda i, sep: (0, 0)),           # layer_norm gamma
            pl.BlockSpec((1, H_), lambda i, sep: (0, 0)),           # layer_norm beta
            pl.BlockSpec((1, H_), lambda i, sep: (0, 0)),           # transform LN gamma
            pl.BlockSpec((1, H_), lambda i, sep: (0, 0)),           # transform LN beta
            pl.BlockSpec((1, H_), lambda i, sep: (0, 0)),           # reranker W (1,H)
            pl.BlockSpec(memory_space=pltpu.MemorySpace.SMEM),      # reranker bias
        ],
        out_specs=[
            pl.BlockSpec((B_, H_), lambda i, sep: (0, 0)),          # dense_vector
            pl.BlockSpec((B_, P_), lambda i, sep: (0, 0)),          # psgs_logit
        ],
    )

    dense_vector, psgs_logit = pl.pallas_call(
        dense_dqr_kernel,
        out_shape=(jax.ShapeDtypeStruct((B_, H_), jnp.float32),
                   jax.ShapeDtypeStruct((B_, P_), jnp.float32)),
        grid_spec=grid_spec,
        compiler_params=pltpu.CompilerParams(
            dimension_semantics=("arbitrary",)),
    )(sep_indices.astype(jnp.int32), hid_bf16, w_fused, b_fused,
      params["g_dense"], params["beta_dense"],
      params["g_transform"], params["beta_transform"],
      params["w_reranker"], params["b_reranker"])
    return dense_vector, psgs_logit


def dense_dqr_reference(hidden_vectors, sep_indices, params):
    """Pure-JAX f32 reference of the same forward (sanity check only)."""
    B_, S_, H_ = hidden_vectors.shape

    cls = hidden_vectors[:, 0, :]
    y = cls @ params["w_dense_t"] + params["b_dense"]
    y = _layernorm(y, params["g_dense"], params["beta_dense"], LN_EPS_DENSE)
    dense = y / jnp.maximum(jnp.linalg.norm(y, axis=-1, keepdims=True), NORM_EPS)

    starts, ends = sep_indices[:, :-1], sep_indices[:, 1:]
    valid = jnp.cumprod((ends > starts + 1).astype(jnp.int32), axis=1) > 0
    pos = jnp.arange(S_)[None, None, :]
    mask = ((pos > starts[:, :, None]) & (pos < ends[:, :, None])
            & valid[:, :, None]).astype(jnp.float32)
    cnt = jnp.maximum(mask.sum(-1, keepdims=True), 1.0)
    pooled = jnp.einsum("bps,bsh->bph", mask, hidden_vectors) / cnt
    t = pooled @ params["w_transform_t"] + params["b_transform"]
    t = 0.5 * t * (1.0 + jax.lax.erf(t * _INV_SQRT2))
    t = _layernorm(t, params["g_transform"], params["beta_transform"], LN_EPS_BERT)
    logits = jnp.sum(t * params["w_reranker"], axis=-1) + params["b_reranker"][0, 0]
    return dense, jnp.where(valid, logits, jnp.float32(jnp.nan))


if __name__ == "__main__":
    key = jax.random.PRNGKey(0)
    keys = jax.random.split(key, 8)

    # synthetic encoder output (see TODO(synk) above) + sep indices
    hidden_vectors = jax.random.normal(keys[0], (B, S, H), jnp.float32)
    # query 0: three valid passages; query 1: 'break' after the first passage
    sep_indices = jnp.array([[5, 9, 13, 15],
                             [4, 8, 9, 12]], dtype=jnp.int32)

    params = {
        # nn.Linear weights are stored PRE-TRANSPOSED ([in, out] == torch W.T)
        # so the kernel never has to transpose on the XLU.
        "w_dense_t": 0.02 * jax.random.normal(keys[1], (H, H), jnp.float32),
        "b_dense": 0.02 * jax.random.normal(keys[2], (1, H), jnp.float32),
        "g_dense": jnp.ones((1, H), jnp.float32),
        "beta_dense": jnp.zeros((1, H), jnp.float32),
        "w_transform_t": 0.02 * jax.random.normal(keys[3], (H, H), jnp.float32),
        "b_transform": 0.02 * jax.random.normal(keys[4], (1, H), jnp.float32),
        "g_transform": jnp.ones((1, H), jnp.float32),
        "beta_transform": jnp.zeros((1, H), jnp.float32),
        # reranker: nn.Linear(H, 1).weight is natively [1, H]; bias lives in SMEM
        "w_reranker": 0.02 * jax.random.normal(keys[5], (1, H), jnp.float32),
        "b_reranker": jnp.zeros((1, 1), jnp.float32),
    }

    dense_vector, psgs_logit = jax.jit(dense_dqr_forward)(
        hidden_vectors, sep_indices, params)
    jax.block_until_ready((dense_vector, psgs_logit))

    # checks: shapes, unit L2 norm, NaN pattern, and agreement with pure-JAX ref
    ref_dense, ref_logit = dense_dqr_reference(hidden_vectors, sep_indices, params)
    assert dense_vector.shape == (B, H) and psgs_logit.shape == (B, P)
    assert bool(jnp.all(jnp.abs(jnp.linalg.norm(dense_vector, axis=1) - 1.0) < 1e-3))
    assert bool(jnp.all(jnp.isnan(psgs_logit) == jnp.isnan(ref_logit)))
    assert bool(jnp.allclose(dense_vector, ref_dense, atol=3e-2, rtol=3e-2))
    assert bool(jnp.allclose(psgs_logit, ref_logit, atol=3e-2, rtol=3e-2,
                             equal_nan=True))
    assert bool(jnp.all(jnp.isfinite(psgs_logit[0])))    # q0: all passages valid
    assert bool(jnp.isfinite(psgs_logit[1, 0]))          # q1: first passage valid
    assert bool(jnp.all(jnp.isnan(psgs_logit[1, 1:])))   # q1: break -> NaN

    print("KERNEL_OK")
</pallas_src>

<mosaic_0001>
module attributes {stable_mosaic.version = 11 : i64} {
  func.func @dense_dqr_kernel(%arg0: i32, %arg1: memref<2x4xi32, #tpu.memory_space<smem>>, %arg2: memref<2x16x128xbf16, #tpu.memory_space<vmem>>, %arg3: memref<128x256xbf16, #tpu.memory_space<vmem>>, %arg4: memref<1x256xf32, #tpu.memory_space<vmem>>, %arg5: memref<1x128xf32, #tpu.memory_space<vmem>>, %arg6: memref<1x128xf32, #tpu.memory_space<vmem>>, %arg7: memref<1x128xf32, #tpu.memory_space<vmem>>, %arg8: memref<1x128xf32, #tpu.memory_space<vmem>>, %arg9: memref<1x128xf32, #tpu.memory_space<vmem>>, %arg10: memref<1x1xf32, #tpu.memory_space<smem>>, %arg11: memref<2x128xf32, #tpu.memory_space<vmem>>, %arg12: memref<2x3xf32, #tpu.memory_space<vmem>>) attributes {dimension_semantics = [#tpu.dimension_semantics<arbitrary>], iteration_bounds = array<i64: 1>, scalar_prefetch = 1 : i64, scratch_operands = 0 : i64, tpu.core_type = #tpu.core_type<tc>, window_params = [{pipeline_mode = #tpu.pipeline_mode<synchronous>, transform_indices = @transform_0, window_bounds = array<i64: 2, 16, 128>}, {pipeline_mode = #tpu.pipeline_mode<synchronous>, transform_indices = @transform_1, window_bounds = array<i64: 128, 256>}, {pipeline_mode = #tpu.pipeline_mode<synchronous>, transform_indices = @transform_2, window_bounds = array<i64: 1, 256>}, {pipeline_mode = #tpu.pipeline_mode<synchronous>, transform_indices = @transform_3, window_bounds = array<i64: 1, 128>}, {pipeline_mode = #tpu.pipeline_mode<synchronous>, transform_indices = @transform_4, window_bounds = array<i64: 1, 128>}, {pipeline_mode = #tpu.pipeline_mode<synchronous>, transform_indices = @transform_5, window_bounds = array<i64: 1, 128>}, {pipeline_mode = #tpu.pipeline_mode<synchronous>, transform_indices = @transform_6, window_bounds = array<i64: 1, 128>}, {pipeline_mode = #tpu.pipeline_mode<synchronous>, transform_indices = @transform_7, window_bounds = array<i64: 1, 128>}, {transform_indices = @transform_8, window_bounds = array<i64: 1, 1>}, {pipeline_mode = #tpu.pipeline_mode<synchronous>, transform_indices = @transform_9, window_bounds = array<i64: 2, 128>}, {pipeline_mode = #tpu.pipeline_mode<synchronous>, transform_indices = @transform_10, window_bounds = array<i64: 2, 3>}]} {
    %0 = tpu.iota {dimensions = array<i32: 0>} : vector<8x32xi32>
    %1 = tpu.iota {dimensions = array<i32: 1>} : vector<8x32xi32>
    %c2_i32 = arith.constant 2 : i32
    %2 = vector.broadcast %c2_i32 : i32 to vector<8x32xi32>
    %3 = arith.cmpi slt, %0, %2 : vector<8x32xi32>
    %c16_i32 = arith.constant 16 : i32
    %4 = vector.broadcast %c16_i32 : i32 to vector<8x32xi32>
    %5 = arith.muli %0, %4 : vector<8x32xi32>
    %6 = arith.cmpi eq, %1, %5 : vector<8x32xi32>
    %7 = arith.andi %3, %6 : vector<8x32xi1>
    %cst = arith.constant 0.000000e+00 : f32
    %8 = vector.broadcast %cst : f32 to vector<8x32xf32>
    %cst_0 = arith.constant 1.000000e+00 : f32
    %9 = vector.broadcast %cst_0 : f32 to vector<8x32xf32>
    %10 = arith.select %7, %9, %8 : vector<8x32xi1>, vector<8x32xf32>
    %11 = tpu.iota {dimensions = array<i32: 0>} : vector<6x3xi32>
    %12 = tpu.iota {dimensions = array<i32: 1>} : vector<6x3xi32>
    %cst_1 = arith.constant 0.000000e+00 : f32
    %13 = vector.broadcast %cst_1 : f32 to vector<6x3xf32>
    %c0_i32 = arith.constant 0 : i32
    %14 = vector.broadcast %c0_i32 : i32 to vector<6x3xi32>
    %15 = arith.addi %12, %14 : vector<6x3xi32>
    %16 = arith.cmpi eq, %11, %15 : vector<6x3xi32>
    %cst_2 = arith.constant 1.000000e+00 : f32
    %17 = vector.broadcast %cst_2 : f32 to vector<6x3xf32>
    %18 = arith.select %16, %17, %13 : vector<6x3xi1>, vector<6x3xf32>
    %c3_i32 = arith.constant 3 : i32
    %19 = vector.broadcast %c3_i32 : i32 to vector<6x3xi32>
    %20 = arith.addi %12, %19 : vector<6x3xi32>
    %21 = arith.cmpi eq, %11, %20 : vector<6x3xi32>
    %cst_3 = arith.constant 1.000000e+00 : f32
    %22 = vector.broadcast %cst_3 : f32 to vector<6x3xf32>
    %23 = arith.select %21, %22, %18 : vector<6x3xi1>, vector<6x3xf32>
    %24 = tpu.iota {dimensions = array<i32: 0>} : vector<2x6xi32>
    %25 = tpu.iota {dimensions = array<i32: 1>} : vector<2x6xi32>
    %c3_i32_4 = arith.constant 3 : i32
    %26 = vector.broadcast %c3_i32_4 : i32 to vector<2x6xi32>
    %27 = arith.muli %24, %26 : vector<2x6xi32>
    %28 = arith.cmpi sge, %25, %27 : vector<2x6xi32>
    %c1_i32 = arith.constant 1 : i32
    %29 = vector.broadcast %c1_i32 : i32 to vector<2x6xi32>
    %30 = arith.addi %24, %29 : vector<2x6xi32>
    %c3_i32_5 = arith.constant 3 : i32
    %31 = vector.broadcast %c3_i32_5 : i32 to vector<2x6xi32>
    %32 = arith.muli %30, %31 : vector<2x6xi32>
    %33 = arith.cmpi slt, %25, %32 : vector<2x6xi32>
    %34 = arith.andi %28, %33 : vector<2x6xi1>
    %cst_6 = arith.constant 1.000000e+00 : f32
    %cst_7 = arith.constant 0.000000e+00 : f32
    %35 = vector.broadcast %cst_6 : f32 to vector<2x6xf32>
    %36 = vector.broadcast %cst_7 : f32 to vector<2x6xf32>
    %37 = arith.select %34, %35, %36 : vector<2x6xi1>, vector<2x6xf32>
    %38 = tpu.iota {dimensions = array<i32: 0>} : vector<2x3xi32>
    %39 = tpu.iota {dimensions = array<i32: 1>} : vector<2x3xi32>
    %false = arith.constant false
    %40 = vector.broadcast %false : i1 to vector<2x3xi1>
    %c0 = arith.constant 0 : index
    %c0_8 = arith.constant 0 : index
    %41 = memref.load %arg1[%c0, %c0_8] : memref<2x4xi32, #tpu.memory_space<smem>>
    %c0_9 = arith.constant 0 : index
    %c1 = arith.constant 1 : index
    %42 = memref.load %arg1[%c0_9, %c1] : memref<2x4xi32, #tpu.memory_space<smem>>
    %c1_i32_10 = arith.constant 1 : i32
    %43 = arith.addi %41, %c1_i32_10 : i32
    %44 = arith.cmpi sgt, %42, %43 : i32
    %c2_i32_11 = arith.constant 2 : i32
    %45 = vector.broadcast %c2_i32_11 : i32 to vector<8x32xi32>
    %46 = arith.cmpi eq, %0, %45 : vector<8x32xi32>
    %c0_i32_12 = arith.constant 0 : i32
    %47 = arith.addi %41, %c0_i32_12 : i32
    %48 = vector.broadcast %47 : i32 to vector<8x32xi32>
    %49 = arith.cmpi sgt, %1, %48 : vector<8x32xi32>
    %50 = arith.andi %46, %49 : vector<8x32xi1>
    %c0_i32_13 = arith.constant 0 : i32
    %51 = arith.addi %42, %c0_i32_13 : i32
    %52 = vector.broadcast %51 : i32 to vector<8x32xi32>
    %53 = arith.cmpi slt, %1, %52 : vector<8x32xi32>
    %54 = arith.andi %50, %53 : vector<8x32xi1>
    %55 = vector.broadcast %44 : i1 to vector<8x32xi1>
    %56 = arith.andi %54, %55 : vector<8x32xi1>
    %cst_14 = arith.constant 1.000000e+00 : f32
    %57 = vector.broadcast %cst_14 : f32 to vector<8x32xf32>
    %58 = arith.select %56, %57, %10 : vector<8x32xi1>, vector<8x32xf32>
    %c0_i32_15 = arith.constant 0 : i32
    %59 = vector.broadcast %c0_i32_15 : i32 to vector<2x3xi32>
    %60 = arith.cmpi eq, %38, %59 : vector<2x3xi32>
    %c0_i32_16 = arith.constant 0 : i32
    %61 = vector.broadcast %c0_i32_16 : i32 to vector<2x3xi32>
    %62 = arith.cmpi eq, %39, %61 : vector<2x3xi32>
    %63 = arith.andi %60, %62 : vector<2x3xi1>
    %64 = vector.broadcast %44 : i1 to vector<2x3xi1>
    %65 = arith.andi %63, %64 : vector<2x3xi1>
    %66 = arith.ori %40, %65 : vector<2x3xi1>
    %c0_17 = arith.constant 0 : index
    %c1_18 = arith.constant 1 : index
    %67 = memref.load %arg1[%c0_17, %c1_18] : memref<2x4xi32, #tpu.memory_space<smem>>
    %c0_19 = arith.constant 0 : index
    %c2 = arith.constant 2 : index
    %68 = memref.load %arg1[%c0_19, %c2] : memref<2x4xi32, #tpu.memory_space<smem>>
    %c1_i32_20 = arith.constant 1 : i32
    %69 = arith.addi %67, %c1_i32_20 : i32
    %70 = arith.cmpi sgt, %68, %69 : i32
    %71 = arith.andi %44, %70 : i1
    %c3_i32_21 = arith.constant 3 : i32
    %72 = vector.broadcast %c3_i32_21 : i32 to vector<8x32xi32>
    %73 = arith.cmpi eq, %0, %72 : vector<8x32xi32>
    %c0_i32_22 = arith.constant 0 : i32
    %74 = arith.addi %67, %c0_i32_22 : i32
    %75 = vector.broadcast %74 : i32 to vector<8x32xi32>
    %76 = arith.cmpi sgt, %1, %75 : vector<8x32xi32>
    %77 = arith.andi %73, %76 : vector<8x32xi1>
    %c0_i32_23 = arith.constant 0 : i32
    %78 = arith.addi %68, %c0_i32_23 : i32
    %79 = vector.broadcast %78 : i32 to vector<8x32xi32>
    %80 = arith.cmpi slt, %1, %79 : vector<8x32xi32>
    %81 = arith.andi %77, %80 : vector<8x32xi1>
    %82 = vector.broadcast %71 : i1 to vector<8x32xi1>
    %83 = arith.andi %81, %82 : vector<8x32xi1>
    %cst_24 = arith.constant 1.000000e+00 : f32
    %84 = vector.broadcast %cst_24 : f32 to vector<8x32xf32>
    %85 = arith.select %83, %84, %58 : vector<8x32xi1>, vector<8x32xf32>
    %c0_i32_25 = arith.constant 0 : i32
    %86 = vector.broadcast %c0_i32_25 : i32 to vector<2x3xi32>
    %87 = arith.cmpi eq, %38, %86 : vector<2x3xi32>
    %c1_i32_26 = arith.constant 1 : i32
    %88 = vector.broadcast %c1_i32_26 : i32 to vector<2x3xi32>
    %89 = arith.cmpi eq, %39, %88 : vector<2x3xi32>
    %90 = arith.andi %87, %89 : vector<2x3xi1>
    %91 = vector.broadcast %71 : i1 to vector<2x3xi1>
    %92 = arith.andi %90, %91 : vector<2x3xi1>
    %93 = arith.ori %66, %92 : vector<2x3xi1>
    %c0_27 = arith.constant 0 : index
    %c2_28 = arith.constant 2 : index
    %94 = memref.load %arg1[%c0_27, %c2_28] : memref<2x4xi32, #tpu.memory_space<smem>>
    %c0_29 = arith.constant 0 : index
    %c3 = arith.constant 3 : index
    %95 = memref.load %arg1[%c0_29, %c3] : memref<2x4xi32, #tpu.memory_space<smem>>
    %c1_i32_30 = arith.constant 1 : i32
    %96 = arith.addi %94, %c1_i32_30 : i32
    %97 = arith.cmpi sgt, %95, %96 : i32
    %98 = arith.andi %71, %97 : i1
    %c4_i32 = arith.constant 4 : i32
    %99 = vector.broadcast %c4_i32 : i32 to vector<8x32xi32>
    %100 = arith.cmpi eq, %0, %99 : vector<8x32xi32>
    %c0_i32_31 = arith.constant 0 : i32
    %101 = arith.addi %94, %c0_i32_31 : i32
    %102 = vector.broadcast %101 : i32 to vector<8x32xi32>
    %103 = arith.cmpi sgt, %1, %102 : vector<8x32xi32>
    %104 = arith.andi %100, %103 : vector<8x32xi1>
    %c0_i32_32 = arith.constant 0 : i32
    %105 = arith.addi %95, %c0_i32_32 : i32
    %106 = vector.broadcast %105 : i32 to vector<8x32xi32>
    %107 = arith.cmpi slt, %1, %106 : vector<8x32xi32>
    %108 = arith.andi %104, %107 : vector<8x32xi1>
    %109 = vector.broadcast %98 : i1 to vector<8x32xi1>
    %110 = arith.andi %108, %109 : vector<8x32xi1>
    %cst_33 = arith.constant 1.000000e+00 : f32
    %111 = vector.broadcast %cst_33 : f32 to vector<8x32xf32>
    %112 = arith.select %110, %111, %85 : vector<8x32xi1>, vector<8x32xf32>
    %c0_i32_34 = arith.constant 0 : i32
    %113 = vector.broadcast %c0_i32_34 : i32 to vector<2x3xi32>
    %114 = arith.cmpi eq, %38, %113 : vector<2x3xi32>
    %c2_i32_35 = arith.constant 2 : i32
    %115 = vector.broadcast %c2_i32_35 : i32 to vector<2x3xi32>
    %116 = arith.cmpi eq, %39, %115 : vector<2x3xi32>
    %117 = arith.andi %114, %116 : vector<2x3xi1>
    %118 = vector.broadcast %98 : i1 to vector<2x3xi1>
    %119 = arith.andi %117, %118 : vector<2x3xi1>
    %120 = arith.ori %93, %119 : vector<2x3xi1>
    %c1_36 = arith.constant 1 : index
    %c0_37 = arith.constant 0 : index
    %121 = memref.load %arg1[%c1_36, %c0_37] : memref<2x4xi32, #tpu.memory_space<smem>>
    %c1_38 = arith.constant 1 : index
    %c1_39 = arith.constant 1 : index
    %122 = memref.load %arg1[%c1_38, %c1_39] : memref<2x4xi32, #tpu.memory_space<smem>>
    %c1_i32_40 = arith.constant 1 : i32
    %123 = arith.addi %121, %c1_i32_40 : i32
    %124 = arith.cmpi sgt, %122, %123 : i32
    %c5_i32 = arith.constant 5 : i32
    %125 = vector.broadcast %c5_i32 : i32 to vector<8x32xi32>
    %126 = arith.cmpi eq, %0, %125 : vector<8x32xi32>
    %c16_i32_41 = arith.constant 16 : i32
    %127 = arith.addi %121, %c16_i32_41 : i32
    %128 = vector.broadcast %127 : i32 to vector<8x32xi32>
    %129 = arith.cmpi sgt, %1, %128 : vector<8x32xi32>
    %130 = arith.andi %126, %129 : vector<8x32xi1>
    %c16_i32_42 = arith.constant 16 : i32
    %131 = arith.addi %122, %c16_i32_42 : i32
    %132 = vector.broadcast %131 : i32 to vector<8x32xi32>
    %133 = arith.cmpi slt, %1, %132 : vector<8x32xi32>
    %134 = arith.andi %130, %133 : vector<8x32xi1>
    %135 = vector.broadcast %124 : i1 to vector<8x32xi1>
    %136 = arith.andi %134, %135 : vector<8x32xi1>
    %cst_43 = arith.constant 1.000000e+00 : f32
    %137 = vector.broadcast %cst_43 : f32 to vector<8x32xf32>
    %138 = arith.select %136, %137, %112 : vector<8x32xi1>, vector<8x32xf32>
    %c1_i32_44 = arith.constant 1 : i32
    %139 = vector.broadcast %c1_i32_44 : i32 to vector<2x3xi32>
    %140 = arith.cmpi eq, %38, %139 : vector<2x3xi32>
    %c0_i32_45 = arith.constant 0 : i32
    %141 = vector.broadcast %c0_i32_45 : i32 to vector<2x3xi32>
    %142 = arith.cmpi eq, %39, %141 : vector<2x3xi32>
    %143 = arith.andi %140, %142 : vector<2x3xi1>
    %144 = vector.broadcast %124 : i1 to vector<2x3xi1>
    %145 = arith.andi %143, %144 : vector<2x3xi1>
    %146 = arith.ori %120, %145 : vector<2x3xi1>
    %c1_46 = arith.constant 1 : index
    %c1_47 = arith.constant 1 : index
    %147 = memref.load %arg1[%c1_46, %c1_47] : memref<2x4xi32, #tpu.memory_space<smem>>
    %c1_48 = arith.constant 1 : index
    %c2_49 = arith.constant 2 : index
    %148 = memref.load %arg1[%c1_48, %c2_49] : memref<2x4xi32, #tpu.memory_space<smem>>
    %c1_i32_50 = arith.constant 1 : i32
    %149 = arith.addi %147, %c1_i32_50 : i32
    %150 = arith.cmpi sgt, %148, %149 : i32
    %151 = arith.andi %124, %150 : i1
    %c6_i32 = arith.constant 6 : i32
    %152 = vector.broadcast %c6_i32 : i32 to vector<8x32xi32>
    %153 = arith.cmpi eq, %0, %152 : vector<8x32xi32>
    %c16_i32_51 = arith.constant 16 : i32
    %154 = arith.addi %147, %c16_i32_51 : i32
    %155 = vector.broadcast %154 : i32 to vector<8x32xi32>
    %156 = arith.cmpi sgt, %1, %155 : vector<8x32xi32>
    %157 = arith.andi %153, %156 : vector<8x32xi1>
    %c16_i32_52 = arith.constant 16 : i32
    %158 = arith.addi %148, %c16_i32_52 : i32
    %159 = vector.broadcast %158 : i32 to vector<8x32xi32>
    %160 = arith.cmpi slt, %1, %159 : vector<8x32xi32>
    %161 = arith.andi %157, %160 : vector<8x32xi1>
    %162 = vector.broadcast %151 : i1 to vector<8x32xi1>
    %163 = arith.andi %161, %162 : vector<8x32xi1>
    %cst_53 = arith.constant 1.000000e+00 : f32
    %164 = vector.broadcast %cst_53 : f32 to vector<8x32xf32>
    %165 = arith.select %163, %164, %138 : vector<8x32xi1>, vector<8x32xf32>
    %c1_i32_54 = arith.constant 1 : i32
    %166 = vector.broadcast %c1_i32_54 : i32 to vector<2x3xi32>
    %167 = arith.cmpi eq, %38, %166 : vector<2x3xi32>
    %c1_i32_55 = arith.constant 1 : i32
    %168 = vector.broadcast %c1_i32_55 : i32 to vector<2x3xi32>
    %169 = arith.cmpi eq, %39, %168 : vector<2x3xi32>
    %170 = arith.andi %167, %169 : vector<2x3xi1>
    %171 = vector.broadcast %151 : i1 to vector<2x3xi1>
    %172 = arith.andi %170, %171 : vector<2x3xi1>
    %173 = arith.ori %146, %172 : vector<2x3xi1>
    %c1_56 = arith.constant 1 : index
    %c2_57 = arith.constant 2 : index
    %174 = memref.load %arg1[%c1_56, %c2_57] : memref<2x4xi32, #tpu.memory_space<smem>>
    %c1_58 = arith.constant 1 : index
    %c3_59 = arith.constant 3 : index
    %175 = memref.load %arg1[%c1_58, %c3_59] : memref<2x4xi32, #tpu.memory_space<smem>>
    %c1_i32_60 = arith.constant 1 : i32
    %176 = arith.addi %174, %c1_i32_60 : i32
    %177 = arith.cmpi sgt, %175, %176 : i32
    %178 = arith.andi %151, %177 : i1
    %c7_i32 = arith.constant 7 : i32
    %179 = vector.broadcast %c7_i32 : i32 to vector<8x32xi32>
    %180 = arith.cmpi eq, %0, %179 : vector<8x32xi32>
    %c16_i32_61 = arith.constant 16 : i32
    %181 = arith.addi %174, %c16_i32_61 : i32
    %182 = vector.broadcast %181 : i32 to vector<8x32xi32>
    %183 = arith.cmpi sgt, %1, %182 : vector<8x32xi32>
    %184 = arith.andi %180, %183 : vector<8x32xi1>
    %c16_i32_62 = arith.constant 16 : i32
    %185 = arith.addi %175, %c16_i32_62 : i32
    %186 = vector.broadcast %185 : i32 to vector<8x32xi32>
    %187 = arith.cmpi slt, %1, %186 : vector<8x32xi32>
    %188 = arith.andi %184, %187 : vector<8x32xi1>
    %189 = vector.broadcast %178 : i1 to vector<8x32xi1>
    %190 = arith.andi %188, %189 : vector<8x32xi1>
    %cst_63 = arith.constant 1.000000e+00 : f32
    %191 = vector.broadcast %cst_63 : f32 to vector<8x32xf32>
    %192 = arith.select %190, %191, %165 : vector<8x32xi1>, vector<8x32xf32>
    %c1_i32_64 = arith.constant 1 : i32
    %193 = vector.broadcast %c1_i32_64 : i32 to vector<2x3xi32>
    %194 = arith.cmpi eq, %38, %193 : vector<2x3xi32>
    %c2_i32_65 = arith.constant 2 : i32
    %195 = vector.broadcast %c2_i32_65 : i32 to vector<2x3xi32>
    %196 = arith.cmpi eq, %39, %195 : vector<2x3xi32>
    %197 = arith.andi %194, %196 : vector<2x3xi1>
    %198 = vector.broadcast %178 : i1 to vector<2x3xi1>
    %199 = arith.andi %197, %198 : vector<2x3xi1>
    %200 = arith.ori %173, %199 : vector<2x3xi1>
    %c0_66 = arith.constant 0 : index
    %c0_67 = arith.constant 0 : index
    %c0_68 = arith.constant 0 : index
    %201 = vector.load %arg2[%c0_66, %c0_67, %c0_68] : memref<2x16x128xbf16, #tpu.memory_space<vmem>>, vector<2x16x128xbf16>
    %202 = vector.shape_cast %201 : vector<2x16x128xbf16> to vector<32x128xbf16>
    %cst_69 = arith.constant dense<0.000000e+00> : vector<8xf32>
    %203 = vector.multi_reduction <add>, %192, %cst_69 [1] : vector<8x32xf32> to vector<8xf32>
    %204 = vector.shape_cast %203 : vector<8xf32> to vector<8x1xf32>
    %cst_70 = arith.constant 1.000000e+00 : f32
    %205 = vector.broadcast %cst_70 : f32 to vector<8x1xf32>
    %206 = arith.maximumf %204, %205 : vector<8x1xf32>
    %207 = arith.truncf %192 : vector<8x32xf32> to vector<8x32xbf16>
    %cst_71 = arith.constant dense<0.000000e+00> : vector<8x128xf32>
    %208 = tpu.matmul %207, %202, %cst_71 {dimension_numbers = #tpu.dot_dimension_numbers<[1], [0], [0], [1], [0, 0, 1, 1], [], []>} : vector<8x32xbf16>, vector<32x128xbf16>, vector<8x128xf32> -> vector<8x128xf32>
    %209 = vector.broadcast %206 : vector<8x1xf32> to vector<8x128xf32>
    %210 = arith.divf %208, %209 : vector<8x128xf32>
    %211 = arith.truncf %210 : vector<8x128xf32> to vector<8x128xbf16>
    %c0_72 = arith.constant 0 : index
    %c0_73 = arith.constant 0 : index
    %212 = vector.load %arg3[%c0_72, %c0_73] : memref<128x256xbf16, #tpu.memory_space<vmem>>, vector<128x256xbf16>
    %cst_74 = arith.constant dense<0.000000e+00> : vector<8x256xf32>
    %213 = tpu.matmul %211, %212, %cst_74 {dimension_numbers = #tpu.dot_dimension_numbers<[1], [0], [0], [1], [0, 0, 1, 1], [], []>} : vector<8x128xbf16>, vector<128x256xbf16>, vector<8x256xf32> -> vector<8x256xf32>
    %c0_75 = arith.constant 0 : index
    %c0_76 = arith.constant 0 : index
    %214 = vector.load %arg4[%c0_75, %c0_76] : memref<1x256xf32, #tpu.memory_space<vmem>>, vector<1x256xf32>
    %215 = vector.broadcast %214 : vector<1x256xf32> to vector<8x256xf32>
    %216 = arith.addf %213, %215 : vector<8x256xf32>
    %217 = vector.extract_strided_slice %216 {offsets = [0, 0], sizes = [2, 128], strides = [1, 1]} : vector<8x256xf32> to vector<2x128xf32>
    %218 = vector.extract_strided_slice %216 {offsets = [2, 128], sizes = [6, 128], strides = [1, 1]} : vector<8x256xf32> to vector<6x128xf32>
    %c0_77 = arith.constant 0 : index
    %c0_78 = arith.constant 0 : index
    %219 = vector.load %arg5[%c0_77, %c0_78] : memref<1x128xf32, #tpu.memory_space<vmem>>, vector<1x128xf32>
    %c0_79 = arith.constant 0 : index
    %c0_80 = arith.constant 0 : index
    %220 = vector.load %arg6[%c0_79, %c0_80] : memref<1x128xf32, #tpu.memory_space<vmem>>, vector<1x128xf32>
    %cst_81 = arith.constant dense<0.000000e+00> : vector<2xf32>
    %221 = vector.multi_reduction <add>, %217, %cst_81 [1] : vector<2x128xf32> to vector<2xf32>
    %222 = vector.shape_cast %221 : vector<2xf32> to vector<2x1xf32>
    %cst_82 = arith.constant 1.280000e+02 : f32
    %223 = vector.broadcast %cst_82 : f32 to vector<2x1xf32>
    %224 = arith.divf %222, %223 : vector<2x1xf32>
    %225 = vector.broadcast %224 : vector<2x1xf32> to vector<2x128xf32>
    %226 = arith.subf %217, %225 : vector<2x128xf32>
    %227 = arith.mulf %226, %226 : vector<2x128xf32>
    %cst_83 = arith.constant dense<0.000000e+00> : vector<2xf32>
    %228 = vector.multi_reduction <add>, %227, %cst_83 [1] : vector<2x128xf32> to vector<2xf32>
    %229 = vector.shape_cast %228 : vector<2xf32> to vector<2x1xf32>
    %cst_84 = arith.constant 1.280000e+02 : f32
    %230 = vector.broadcast %cst_84 : f32 to vector<2x1xf32>
    %231 = arith.divf %229, %230 : vector<2x1xf32>
    %232 = vector.broadcast %224 : vector<2x1xf32> to vector<2x128xf32>
    %233 = arith.subf %217, %232 : vector<2x128xf32>
    %cst_85 = arith.constant 9.99999974E-6 : f32
    %234 = vector.broadcast %cst_85 : f32 to vector<2x1xf32>
    %235 = arith.addf %231, %234 : vector<2x1xf32>
    %236 = math.rsqrt %235 : vector<2x1xf32>
    %237 = vector.broadcast %236 : vector<2x1xf32> to vector<2x128xf32>
    %238 = arith.mulf %233, %237 : vector<2x128xf32>
    %239 = vector.broadcast %219 : vector<1x128xf32> to vector<2x128xf32>
    %240 = arith.mulf %238, %239 : vector<2x128xf32>
    %241 = vector.broadcast %220 : vector<1x128xf32> to vector<2x128xf32>
    %242 = arith.addf %240, %241 : vector<2x128xf32>
    %243 = arith.mulf %242, %242 : vector<2x128xf32>
    %cst_86 = arith.constant dense<0.000000e+00> : vector<2xf32>
    %244 = vector.multi_reduction <add>, %243, %cst_86 [1] : vector<2x128xf32> to vector<2xf32>
    %245 = vector.shape_cast %244 : vector<2xf32> to vector<2x1xf32>
    %cst_87 = arith.constant 1.000000e-24 : f32
    %246 = vector.broadcast %cst_87 : f32 to vector<2x1xf32>
    %247 = arith.maximumf %245, %246 : vector<2x1xf32>
    %248 = math.rsqrt %247 : vector<2x1xf32>
    %249 = vector.broadcast %248 : vector<2x1xf32> to vector<2x128xf32>
    %250 = arith.mulf %242, %249 : vector<2x128xf32>
    %c0_88 = arith.constant 0 : index
    %c0_89 = arith.constant 0 : index
    %251 = vector.load %arg11[%c0_88, %c0_89] : memref<2x128xf32, #tpu.memory_space<vmem>>, vector<2x128xf32>
    tpu.vector_store %arg11[%c0_88, %c0_89], %250 {strides = array<i32>} : memref<2x128xf32, #tpu.memory_space<vmem>>, vector<2x128xf32>,
    %cst_90 = arith.constant 5.000000e-01 : f32
    %252 = vector.broadcast %cst_90 : f32 to vector<6x128xf32>
    %253 = arith.mulf %252, %218 : vector<6x128xf32>
    %cst_91 = arith.constant 0.707106769 : f32
    %254 = vector.broadcast %cst_91 : f32 to vector<6x128xf32>
    %255 = arith.mulf %218, %254 : vector<6x128xf32>
    %256 = math.erf %255 : vector<6x128xf32>
    %cst_92 = arith.constant 1.000000e+00 : f32
    %257 = vector.broadcast %cst_92 : f32 to vector<6x128xf32>
    %258 = arith.addf %257, %256 : vector<6x128xf32>
    %259 = arith.mulf %253, %258 : vector<6x128xf32>
    %c0_93 = arith.constant 0 : index
    %c0_94 = arith.constant 0 : index
    %260 = vector.load %arg7[%c0_93, %c0_94] : memref<1x128xf32, #tpu.memory_space<vmem>>, vector<1x128xf32>
    %c0_95 = arith.constant 0 : index
    %c0_96 = arith.constant 0 : index
    %261 = vector.load %arg8[%c0_95, %c0_96] : memref<1x128xf32, #tpu.memory_space<vmem>>, vector<1x128xf32>
    %cst_97 = arith.constant dense<0.000000e+00> : vector<6xf32>
    %262 = vector.multi_reduction <add>, %259, %cst_97 [1] : vector<6x128xf32> to vector<6xf32>
    %263 = vector.shape_cast %262 : vector<6xf32> to vector<6x1xf32>
    %cst_98 = arith.constant 1.280000e+02 : f32
    %264 = vector.broadcast %cst_98 : f32 to vector<6x1xf32>
    %265 = arith.divf %263, %264 : vector<6x1xf32>
    %266 = vector.broadcast %265 : vector<6x1xf32> to vector<6x128xf32>
    %267 = arith.subf %259, %266 : vector<6x128xf32>
    %268 = arith.mulf %267, %267 : vector<6x128xf32>
    %cst_99 = arith.constant dense<0.000000e+00> : vector<6xf32>
    %269 = vector.multi_reduction <add>, %268, %cst_99 [1] : vector<6x128xf32> to vector<6xf32>
    %270 = vector.shape_cast %269 : vector<6xf32> to vector<6x1xf32>
    %cst_100 = arith.constant 1.280000e+02 : f32
    %271 = vector.broadcast %cst_100 : f32 to vector<6x1xf32>
    %272 = arith.divf %270, %271 : vector<6x1xf32>
    %273 = vector.broadcast %265 : vector<6x1xf32> to vector<6x128xf32>
    %274 = arith.subf %259, %273 : vector<6x128xf32>
    %cst_101 = arith.constant 9.99999996E-13 : f32
    %275 = vector.broadcast %cst_101 : f32 to vector<6x1xf32>
    %276 = arith.addf %272, %275 : vector<6x1xf32>
    %277 = math.rsqrt %276 : vector<6x1xf32>
    %278 = vector.broadcast %277 : vector<6x1xf32> to vector<6x128xf32>
    %279 = arith.mulf %274, %278 : vector<6x128xf32>
    %280 = vector.broadcast %260 : vector<1x128xf32> to vector<6x128xf32>
    %281 = arith.mulf %279, %280 : vector<6x128xf32>
    %282 = vector.broadcast %261 : vector<1x128xf32> to vector<6x128xf32>
    %283 = arith.addf %281, %282 : vector<6x128xf32>
    %c0_102 = arith.constant 0 : index
    %c0_103 = arith.constant 0 : index
    %284 = vector.load %arg9[%c0_102, %c0_103] : memref<1x128xf32, #tpu.memory_space<vmem>>, vector<1x128xf32>
    %285 = vector.broadcast %284 : vector<1x128xf32> to vector<6x128xf32>
    %286 = arith.mulf %283, %285 : vector<6x128xf32>
    %cst_104 = arith.constant dense<0.000000e+00> : vector<6xf32>
    %287 = vector.multi_reduction <add>, %286, %cst_104 [1] : vector<6x128xf32> to vector<6xf32>
    %288 = vector.shape_cast %287 : vector<6xf32> to vector<6x1xf32>
    %289 = vector.broadcast %288 : vector<6x1xf32> to vector<6x3xf32>
    %290 = arith.mulf %289, %23 : vector<6x3xf32>
    %cst_105 = arith.constant dense<0.000000e+00> : vector<2x3xf32>
    %291 = tpu.matmul %37, %290, %cst_105 {dimension_numbers = #tpu.dot_dimension_numbers<[1], [0], [0], [1], [0, 0, 1, 1], [], []>} : vector<2x6xf32>, vector<6x3xf32>, vector<2x3xf32> -> vector<2x3xf32>
    %c0_106 = arith.constant 0 : index
    %c0_107 = arith.constant 0 : index
    %292 = memref.load %arg10[%c0_106, %c0_107] : memref<1x1xf32, #tpu.memory_space<smem>>
    %293 = vector.broadcast %292 : f32 to vector<2x3xf32>
    %294 = arith.addf %291, %293 : vector<2x3xf32>
    %cst_108 = arith.constant 0x7FC00000 : f32
    %295 = vector.broadcast %cst_108 : f32 to vector<2x3xf32>
    %296 = arith.select %200, %294, %295 : vector<2x3xi1>, vector<2x3xf32>
    %c0_109 = arith.constant 0 : index
    %c0_110 = arith.constant 0 : index
    %297 = vector.load %arg12[%c0_109, %c0_110] : memref<2x3xf32, #tpu.memory_space<vmem>>, vector<2x3xf32>
    tpu.vector_store %arg12[%c0_109, %c0_110], %296 {strides = array<i32>} : memref<2x3xf32, #tpu.memory_space<vmem>>, vector<2x3xf32>,
    return
  }
  func.func @transform_0(%arg0: i32, %arg1: memref<2x4xi32, #tpu.memory_space<smem>>) -> (i32, i32, i32) {
    %c0_i32 = arith.constant 0 : i32
    %c0_i32_0 = arith.constant 0 : i32
    %c0_i32_1 = arith.constant 0 : i32
    %c0_i32_2 = arith.constant 0 : i32
    return %c0_i32, %c0_i32_0, %c0_i32_1 : i32, i32, i32
  }
  func.func @transform_1(%arg0: i32, %arg1: memref<2x4xi32, #tpu.memory_space<smem>>) -> (i32, i32) {
    %c0_i32 = arith.constant 0 : i32
    %c0_i32_0 = arith.constant 0 : i32
    %c0_i32_1 = arith.constant 0 : i32
    return %c0_i32, %c0_i32_0 : i32, i32
  }
  func.func @transform_2(%arg0: i32, %arg1: memref<2x4xi32, #tpu.memory_space<smem>>) -> (i32, i32) {
    %c0_i32 = arith.constant 0 : i32
    %c0_i32_0 = arith.constant 0 : i32
    %c0_i32_1 = arith.constant 0 : i32
    return %c0_i32, %c0_i32_0 : i32, i32
  }
  func.func @transform_3(%arg0: i32, %arg1: memref<2x4xi32, #tpu.memory_space<smem>>) -> (i32, i32) {
    %c0_i32 = arith.constant 0 : i32
    %c0_i32_0 = arith.constant 0 : i32
    %c0_i32_1 = arith.constant 0 : i32
    return %c0_i32, %c0_i32_0 : i32, i32
  }
  func.func @transform_4(%arg0: i32, %arg1: memref<2x4xi32, #tpu.memory_space<smem>>) -> (i32, i32) {
    %c0_i32 = arith.constant 0 : i32
    %c0_i32_0 = arith.constant 0 : i32
    %c0_i32_1 = arith.constant 0 : i32
    return %c0_i32, %c0_i32_0 : i32, i32
  }
  func.func @transform_5(%arg0: i32, %arg1: memref<2x4xi32, #tpu.memory_space<smem>>) -> (i32, i32) {
    %c0_i32 = arith.constant 0 : i32
    %c0_i32_0 = arith.constant 0 : i32
    %c0_i32_1 = arith.constant 0 : i32
    return %c0_i32, %c0_i32_0 : i32, i32
  }
  func.func @transform_6(%arg0: i32, %arg1: memref<2x4xi32, #tpu.memory_space<smem>>) -> (i32, i32) {
    %c0_i32 = arith.constant 0 : i32
    %c0_i32_0 = arith.constant 0 : i32
    %c0_i32_1 = arith.constant 0 : i32
    return %c0_i32, %c0_i32_0 : i32, i32
  }
  func.func @transform_7(%arg0: i32, %arg1: memref<2x4xi32, #tpu.memory_space<smem>>) -> (i32, i32) {
    %c0_i32 = arith.constant 0 : i32
    %c0_i32_0 = arith.constant 0 : i32
    %c0_i32_1 = arith.constant 0 : i32
    return %c0_i32, %c0_i32_0 : i32, i32
  }
  func.func @transform_8(%arg0: i32, %arg1: memref<2x4xi32, #tpu.memory_space<smem>>) -> (i32, i32) {
    %c0_i32 = arith.constant 0 : i32
    %c0_i32_0 = arith.constant 0 : i32
    %c0_i32_1 = arith.constant 0 : i32
    return %c0_i32, %c0_i32_0 : i32, i32
  }
  func.func @transform_9(%arg0: i32, %arg1: memref<2x4xi32, #tpu.memory_space<smem>>) -> (i32, i32) {
    %c0_i32 = arith.constant 0 : i32
    %c0_i32_0 = arith.constant 0 : i32
    %c0_i32_1 = arith.constant 0 : i32
    return %c0_i32, %c0_i32_0 : i32, i32
  }
  func.func @transform_10(%arg0: i32, %arg1: memref<2x4xi32, #tpu.memory_space<smem>>) -> (i32, i32) {
    %c0_i32 = arith.constant 0 : i32
    %c0_i32_0 = arith.constant 0 : i32
    %c0_i32_1 = arith.constant 0 : i32
    return %c0_i32, %c0_i32_0 : i32, i32
  }
}

</mosaic_0001>

<llo_original>
// kernel: dense_dqr_forward.1
$region0: #{dense_dqr_forward.1}
  #allocation0 [shape = 'u32[]', space=smem, size = 0x4, offset = 0x4, fixed_abs, tag = 'smem constant byte address 0x4 - core index']
  #allocation1 [shape = 'u32[72,128]{1,0:T(1,128)}', space=vmem, size = 0x9000, scoped, tag = 'internal scratch']
  #allocation2 [shape = 's32[1]{0}', space=sflag, size = 0x4, scoped, tag = 'scoped memory for dense_dqr_forward.1']
  #allocation3 [shape = 'u8[1024]{0}', space=smem, size = 0x400, scoped, tag = 'prefetched SMEM operand 0']
  #allocation4 [shape = 'f32[1,1]{1,0:T(1,128)S(6)}', space=smem, size = 0x200, scoped, tag = 'scoped memory for dense_dqr_forward.1']
  %s0 = inlined_call_operand.vmem [shape: s32[2,4], index: 0, kind: input, shape index: {}]
  %s1 = inlined_call_operand.vmem [shape: bf16[2,16,128], index: 1, kind: input, shape index: {}]
  %s2 = inlined_call_operand.vmem [shape: bf16[128,256], index: 2, kind: input, shape index: {}]
  %s3 = inlined_call_operand.vmem [shape: f32[1,256], index: 3, kind: input, shape index: {}]
  %s4 = inlined_call_operand.vmem [shape: f32[1,128], index: 4, kind: input, shape index: {}]
  %s5 = inlined_call_operand.vmem [shape: f32[1,128], index: 5, kind: input, shape index: {}]
  %s6 = inlined_call_operand.vmem [shape: f32[1,128], index: 6, kind: input, shape index: {}]
  %s7 = inlined_call_operand.vmem [shape: f32[1,128], index: 7, kind: input, shape index: {}]
  %s8 = inlined_call_operand.vmem [shape: f32[1,128], index: 8, kind: input, shape index: {}]
  %s9 = inlined_call_operand.<no memory space> [shape: f32[1,1], index: 9, kind: input, shape index: {}]
  %s10 = inlined_call_operand.hbm [shape: f32[2,128], index: 10, kind: output, shape index: {0}]
  %s11 = inlined_call_operand.hbm [shape: f32[2,3], index: 11, kind: output, shape index: {1}]
  %12 = xla_tuple %s10, %s11
  %s13 = sld [smem:[#allocation0]]
  $region54: #{dense_dqr_forward.1} parent=0
    _
  %s15 = ssub.s32 1, %s13
  %s16 = scalar_select 0, %s15, %s13
  %s18 = sshll.u32 %s0, 4
  %s19 = int_to_ptr.vmem [resolvable:$true] %s18
  %21 = dma.vmem_to_smem %s19, 32, [#allocation3], [#allocation2]
  %22 = sst [smem:[#allocation4]] %s9
  %24 = dma.done [#allocation2], 32
  %25 = sfence
  $region1: #{dense_dqr_forward.1} parent=0
    #allocation5 [shape = 'u8[1024]{0}', space=vmem, size = 0x400, scoped, tag = 'output window, operand 0, single buffered']
    #allocation6 [shape = 's32[1]{0}', space=sflag, size = 0x4, scoped, tag = 'scoped memory for dense_dqr_forward.1']
    #allocation7 [shape = 'u8[1024]{0}', space=vmem, size = 0x400, scoped, tag = 'output window, operand 1, single buffered']
    #allocation8 [shape = 's32[1]{0}', space=sflag, size = 0x4, scoped, tag = 'scoped memory for dense_dqr_forward.1']
    %26 = vsyncpa [#allocation6], 0
    %27 = vsyncpa [#allocation8], 0
    // Predicated region
    $region2: #{dense_dqr_forward.1} parent=1 // pred_check
      _
    $region3: #{dense_dqr_forward.1} parent=1 // pred_check_branch
      %29 = sbr.rel (0) target = $region5
    $region4: #{dense_dqr_forward.1} parent=1 // pred_region
      _
    $region5: #{dense_dqr_forward.1} parent=1 // pred_fallthru
      _
    // Predicated region
    $region6: #{dense_dqr_forward.1} parent=1 // pred_check
      _
    $region7: #{dense_dqr_forward.1} parent=1 // pred_check_branch
      %31 = sbr.rel (0) target = $region9
    $region8: #{dense_dqr_forward.1} parent=1 // pred_region
      _
    $region9: #{dense_dqr_forward.1} parent=1 // pred_fallthru
      _
    // Predicated region
    $region10: #{dense_dqr_forward.1} parent=1 // pred_check
      _
    $region11: #{dense_dqr_forward.1} parent=1 // pred_check_branch
      %33 = sbr.rel (0) target = $region13
    $region12: #{dense_dqr_forward.1} parent=1 // pred_region
      _
    $region13: #{dense_dqr_forward.1} parent=1 // pred_fallthru
      _
    // Predicated region
    $region14: #{dense_dqr_forward.1} parent=1 // pred_check
      _
    $region15: #{dense_dqr_forward.1} parent=1 // pred_check_branch
      %35 = sbr.rel (0) target = $region17
    $region16: #{dense_dqr_forward.1} parent=1 // pred_region
      _
    $region17: #{dense_dqr_forward.1} parent=1 // pred_fallthru
      _
    // Predicated region
    $region18: #{dense_dqr_forward.1} parent=1 // pred_check
      _
    $region19: #{dense_dqr_forward.1} parent=1 // pred_check_branch
      %37 = sbr.rel (0) target = $region21
    $region20: #{dense_dqr_forward.1} parent=1 // pred_region
      _
    $region21: #{dense_dqr_forward.1} parent=1 // pred_fallthru
      _
    // Predicated region
    $region22: #{dense_dqr_forward.1} parent=1 // pred_check
      _
    $region23: #{dense_dqr_forward.1} parent=1 // pred_check_branch
      %39 = sbr.rel (0) target = $region25
    $region24: #{dense_dqr_forward.1} parent=1 // pred_region
      _
    $region25: #{dense_dqr_forward.1} parent=1 // pred_fallthru
      _
    // Predicated region
    $region26: #{dense_dqr_forward.1} parent=1 // pred_check
      _
    $region27: #{dense_dqr_forward.1} parent=1 // pred_check_branch
      %41 = sbr.rel (0) target = $region29
    $region28: #{dense_dqr_forward.1} parent=1 // pred_region
      _
    $region29: #{dense_dqr_forward.1} parent=1 // pred_fallthru
      _
    // Predicated region
    $region30: #{dense_dqr_forward.1} parent=1 // pred_check
      _
    $region31: #{dense_dqr_forward.1} parent=1 // pred_check_branch
      %43 = sbr.rel (0) target = $region33
    $region32: #{dense_dqr_forward.1} parent=1 // pred_region
      _
    $region33: #{dense_dqr_forward.1} parent=1 // pred_fallthru
      _
    // Predicated region
    $region34: #{dense_dqr_forward.1} parent=1 // pred_check
      _
    $region35: #{dense_dqr_forward.1} parent=1 // pred_check_branch
      %45 = sbr.rel (0) target = $region37
    $region36: #{dense_dqr_forward.1} parent=1 // pred_region
      _
    $region37: #{dense_dqr_forward.1} parent=1 // pred_fallthru
      _
    %v47 = vlaneseq
    %v48 = vshrl.u32 %v47, 7
    %v49 = vlaneseq
    %v50 = vand.u32 %v49, 127
    %vm51 = vcmp.lt.s32.totalorder %v48, 2
    %v52 = vmul.u32 %v48, 16
    %vm53 = vcmp.eq.s32.totalorder %v50, %v52
    %vm54 = vmand %vm51, %vm53
    %v55 = vsel %vm54, 1.0, 0.0
    %vm56 = vcmp.eq.s32.totalorder %v48, %v50
    %v57 = vsel %vm56, 1.0, 0.0
    %v58 = vadd.s32 %v50, 3
    %vm59 = vcmp.eq.s32.totalorder %v48, %v58
    %v60 = vsel %vm59, 1.0, %v57
    %v61 = vmul.u32 %v48, 3
    %vm62 = vcmp.ge.s32.totalorder %v50, %v61
    %v63 = vadd.s32 %v48, 1
    %v64 = vmul.u32 %v63, 3
    %vm65 = vcmp.lt.s32.totalorder %v50, %v64
    %vm66 = vmand %vm62, %vm65
    %v67 = vsel %vm66, 1.0, 0.0
    %s68 = sld [smem:[#allocation3]]
    %s69 = sld [smem:[#allocation3 + $0x1]]
    %s70 = sadd.s32 %s68, 1
    %p71 = scmp.gt.s32.totalorder %s69, %s70
    %vm72 = vcmp.eq.s32.totalorder %v48, 2
    %v73 = vstv %s68
    %vm74 = vcmp.gt.s32.totalorder %v50, %v73
    %vm75 = vmand %vm72, %vm74
    %v76 = vstv %s69
    %vm77 = vcmp.lt.s32.totalorder %v50, %v76
    %vm78 = vmand %vm75, %vm77
    %s79 = scalar_select %p71, 1, 0
    %v80 = vstv %s79
    %vm81 = vcmp.eq.s32.totalorder %v80, 1
    %vm82 = vmand %vm78, %vm81
    %v83 = vsel %vm82, 1.0, %v55
    %vm84 = vcmp.eq.s32.totalorder %v48, 0
    %vm85 = vcmp.eq.s32.totalorder %v50, 0
    %vm86 = vmand %vm84, %vm85
    %vm87 = vmand %vm86, %vm81
    %s88 = sld [smem:[#allocation3 + $0x2]]
    %s89 = sadd.s32 %s69, 1
    %p90 = scmp.gt.s32.totalorder %s88, %s89
    %p91 = pnand %p71, %p90
    %p92 = pneg %p91
    %vm93 = vcmp.eq.s32.totalorder %v48, 3
    %vm94 = vcmp.gt.s32.totalorder %v50, %v76
    %vm95 = vmand %vm93, %vm94
    %v96 = vstv %s88
    %vm97 = vcmp.lt.s32.totalorder %v50, %v96
    %vm98 = vmand %vm95, %vm97
    %s99 = scalar_select %p92, 1, 0
    %v100 = vstv %s99
    %vm101 = vcmp.eq.s32.totalorder %v100, 1
    %vm102 = vmand %vm98, %vm101
    %v103 = vsel %vm102, 1.0, %v83
    %vm104 = vcmp.eq.s32.totalorder %v50, 1
    %vm105 = vmand %vm84, %vm104
    %vm106 = vmand %vm105, %vm101
    %vm107 = vmor %vm87, %vm106
    %s108 = sld [smem:[#allocation3 + $0x3]]
    %s109 = sadd.s32 %s88, 1
    %p110 = scmp.gt.s32.totalorder %s108, %s109
    %p111 = pnand %p92, %p110
    %p112 = pneg %p111
    %vm113 = vcmp.eq.s32.totalorder %v48, 4
    %vm114 = vcmp.gt.s32.totalorder %v50, %v96
    %vm115 = vmand %vm113, %vm114
    %v116 = vstv %s108
    %vm117 = vcmp.lt.s32.totalorder %v50, %v116
    %vm118 = vmand %vm115, %vm117
    %s119 = scalar_select %p112, 1, 0
    %v120 = vstv %s119
    %vm121 = vcmp.eq.s32.totalorder %v120, 1
    %vm122 = vmand %vm118, %vm121
    %v123 = vsel %vm122, 1.0, %v103
    %vm124 = vcmp.eq.s32.totalorder %v50, 2
    %vm125 = vmand %vm84, %vm124
    %vm126 = vmand %vm125, %vm121
    %vm127 = vmor %vm107, %vm126
    %s128 = sld [smem:[#allocation3 + $0x80]]
    %s129 = sld [smem:[#allocation3 + $0x81]]
    %s130 = sadd.s32 %s128, 1
    %p131 = scmp.gt.s32.totalorder %s129, %s130
    %vm132 = vcmp.eq.s32.totalorder %v48, 5
    %s133 = sadd.s32 %s128, 16
    %v134 = vstv %s133
    %vm135 = vcmp.gt.s32.totalorder %v50, %v134
    %vm136 = vmand %vm132, %vm135
    %s137 = sadd.s32 %s129, 16
    %v138 = vstv %s137
    %vm139 = vcmp.lt.s32.totalorder %v50, %v138
    %vm140 = vmand %vm136, %vm139
    %s141 = scalar_select %p131, 1, 0
    %v142 = vstv %s141
    %vm143 = vcmp.eq.s32.totalorder %v142, 1
    %vm144 = vmand %vm140, %vm143
    %v145 = vsel %vm144, 1.0, %v123
    %vm146 = vcmp.eq.s32.totalorder %v48, 1
    %vm147 = vmand %vm146, %vm85
    %vm148 = vmand %vm147, %vm143
    %vm149 = vmor %vm127, %vm148
    %s150 = sld [smem:[#allocation3 + $0x82]]
    %s151 = sadd.s32 %s129, 1
    %p152 = scmp.gt.s32.totalorder %s150, %s151
    %p153 = pnand %p131, %p152
    %p154 = pneg %p153
    %vm155 = vcmp.eq.s32.totalorder %v48, 6
    %vm156 = vcmp.gt.s32.totalorder %v50, %v138
    %vm157 = vmand %vm155, %vm156
    %s158 = sadd.s32 %s150, 16
    %v159 = vstv %s158
    %vm160 = vcmp.lt.s32.totalorder %v50, %v159
    %vm161 = vmand %vm157, %vm160
    %s162 = scalar_select %p154, 1, 0
    %v163 = vstv %s162
    %vm164 = vcmp.eq.s32.totalorder %v163, 1
    %vm165 = vmand %vm161, %vm164
    %v166 = vsel %vm165, 1.0, %v145
    %vm167 = vmand %vm146, %vm104
    %vm168 = vmand %vm167, %vm164
    %vm169 = vmor %vm149, %vm168
    %s170 = sld [smem:[#allocation3 + $0x83]]
    %s171 = sadd.s32 %s150, 1
    %p172 = scmp.gt.s32.totalorder %s170, %s171
    %p173 = pnand %p154, %p172
    %p174 = pneg %p173
    %vm175 = vcmp.eq.s32.totalorder %v48, 7
    %vm176 = vcmp.gt.s32.totalorder %v50, %v159
    %vm177 = vmand %vm175, %vm176
    %s178 = sadd.s32 %s170, 16
    %v179 = vstv %s178
    %vm180 = vcmp.lt.s32.totalorder %v50, %v179
    %vm181 = vmand %vm177, %vm180
    %s182 = scalar_select %p174, 1, 0
    %v183 = vstv %s182
    %vm184 = vcmp.eq.s32.totalorder %v183, 1
    %vm185 = vmand %vm181, %vm184
    %v186 = vsel %vm185, 1.0, %v166
    %vm187 = vmand %vm146, %vm124
    %vm188 = vmand %vm187, %vm184
    %vm189 = vmor %vm169, %vm188
    %v190 = vld [vmem:[%s1] sm:$0xf]
    %v191 = vld [vmem:[%s1 + $0x4] sm:$0xf]
    %v192 = vld [vmem:[%s1 + $0x8] sm:$0xf]
    %v193 = vld [vmem:[%s1 + $0xc] sm:$0xf]
    %vm194 = vcmask 261120
    %v195 = vsel %vm194, %v186, 0.0
    %196 = vadd.xlane.f32.xlu0 %v195
    %v197 = vpop.xlane.xlu0 %196
    %v198 = vmax.f32 %v197, 1.0
    %v199 = vpack.c.bf16 %v186, %v186
    %v204 = vunpack.c.l.b16 %v190
    %v205 = vunpack.c.l.b16 %v191
    %v206 = vunpack.c.l.b16 %v192
    %v207 = vunpack.c.l.b16 %v193
    %v208 = vpack.c.b16 %v205, %v204
    %v209 = vpack.c.b16 %v207, %v206
    %v213 = vsel %vm194, %v199, 0
    %215 = vmatpush.bf16.msra.mxu0 0
    %216 = vmatpush.bf16.msra.mxu0 0
    %217 = vmatpush.bf16.msra.mxu0 0
    %218 = vmatpush.bf16.msra.mxu0 0
    %219 = vmatpush.bf16.msra.mxu0 0
    %220 = vmatpush.bf16.msra.mxu0 0
    %221 = vmatpush.bf16.msra.mxu0 %v209
    %222 = vmatpush.bf16.msra.mxu0 %v208
    %223 = vmatmul.bf16.gmra.mxu0 %v213
    %v224 = vpop.f32.mrf.mxu0
    %v225 = vadd.f32 0.0, %v224
    %v226 = vpop.f32.mrf.mxu0
    %227 = vdwg.mxu0
    %v228 = vrcp.pop %v198
    %v229 = vmul.f32 %v198, %v228
    %v230 = vsub.f32 1.0, %v229
    %v231 = vmul.f32 %v228, %v230
    %v232 = vadd.f32 %v228, %v231
    %vm233 = vweird.f32 %v198
    %vm234 = vweird.f32 %v228
    %vm235 = vmor %vm233, %vm234
    %v236 = vsel %vm235, %v228, %v232
    %v237 = vand.u32 2147483647, %v198
    %vm238 = vcmp.eq.f32.partialorder %v237, 8.507059e+37
    %v239 = vand.u32 %v198, 2147483648
    %v240 = vor.u32 1.1754944e-38, %v239
    %v241 = vsel %vm238, %v240, %v236
    %v242 = vmul.f32 %v225, %v241
    %v243 = vpack.c.bf16 %v242, %v242
    %v244 = vld [vmem:[%s2] sm:$0xff]
    %v245 = vld [vmem:[%s2 + $0x8] sm:$0xff]
    %v246 = vld [vmem:[%s2 + $0x10] sm:$0xff]
    %v247 = vld [vmem:[%s2 + $0x18] sm:$0xff]
    %v248 = vld [vmem:[%s2 + $0x20] sm:$0xff]
    %v249 = vld [vmem:[%s2 + $0x28] sm:$0xff]
    %v250 = vld [vmem:[%s2 + $0x30] sm:$0xff]
    %v251 = vld [vmem:[%s2 + $0x38] sm:$0xff]
    %v252 = vld [vmem:[%s2 + $0x40] sm:$0xff]
    %v253 = vld [vmem:[%s2 + $0x48] sm:$0xff]
    %v254 = vld [vmem:[%s2 + $0x50] sm:$0xff]
    %v255 = vld [vmem:[%s2 + $0x58] sm:$0xff]
    %v256 = vld [vmem:[%s2 + $0x60] sm:$0xff]
    %v257 = vld [vmem:[%s2 + $0x68] sm:$0xff]
    %v258 = vld [vmem:[%s2 + $0x70] sm:$0xff]
    %v259 = vld [vmem:[%s2 + $0x78] sm:$0xff]
    %v260 = vld [vmem:[%s3] sm:$0x3]
    %v262 = vperm.slane %v260, 0
    %v263 = vperm.slane %v260, 1
    %v282 = vunpack.c.l.b16 %v244
    %v283 = vunpack.c.h.b16 %v244
    %v284 = vunpack.c.l.b16 %v245
    %v285 = vunpack.c.h.b16 %v245
    %v286 = vunpack.c.l.b16 %v246
    %v287 = vunpack.c.h.b16 %v246
    %v288 = vunpack.c.l.b16 %v247
    %v289 = vunpack.c.h.b16 %v247
    %v290 = vunpack.c.l.b16 %v248
    %v291 = vunpack.c.h.b16 %v248
    %v292 = vunpack.c.l.b16 %v249
    %v293 = vunpack.c.h.b16 %v249
    %v294 = vunpack.c.l.b16 %v250
    %v295 = vunpack.c.h.b16 %v250
    %v296 = vunpack.c.l.b16 %v251
    %v297 = vunpack.c.h.b16 %v251
    %v298 = vunpack.c.l.b16 %v252
    %v299 = vunpack.c.h.b16 %v252
    %v300 = vunpack.c.l.b16 %v253
    %v301 = vunpack.c.h.b16 %v253
    %v302 = vunpack.c.l.b16 %v254
    %v303 = vunpack.c.h.b16 %v254
    %v304 = vunpack.c.l.b16 %v255
    %v305 = vunpack.c.h.b16 %v255
    %v306 = vunpack.c.l.b16 %v256
    %v307 = vunpack.c.h.b16 %v256
    %v308 = vunpack.c.l.b16 %v257
    %v309 = vunpack.c.h.b16 %v257
    %v310 = vunpack.c.l.b16 %v258
    %v311 = vunpack.c.h.b16 %v258
    %v312 = vunpack.c.l.b16 %v259
    %v313 = vunpack.c.h.b16 %v259
    %v314 = vpack.c.b16 %v284, %v282
    %v315 = vpack.c.b16 %v285, %v283
    %v316 = vpack.c.b16 %v288, %v286
    %v317 = vpack.c.b16 %v289, %v287
    %v318 = vpack.c.b16 %v292, %v290
    %v319 = vpack.c.b16 %v293, %v291
    %v320 = vpack.c.b16 %v296, %v294
    %v321 = vpack.c.b16 %v297, %v295
    %v322 = vpack.c.b16 %v300, %v298
    %v323 = vpack.c.b16 %v301, %v299
    %v324 = vpack.c.b16 %v304, %v302
    %v325 = vpack.c.b16 %v305, %v303
    %v326 = vpack.c.b16 %v308, %v306
    %v327 = vpack.c.b16 %v309, %v307
    %v328 = vpack.c.b16 %v312, %v310
    %v329 = vpack.c.b16 %v313, %v311
    %346 = vmatpush.bf16.msra.mxu0 %v328
    %347 = vmatpush.bf16.msra.mxu0 %v326
    %348 = vmatpush.bf16.msra.mxu0 %v324
    %349 = vmatpush.bf16.msra.mxu0 %v322
    %350 = vmatpush.bf16.msra.mxu0 %v320
    %351 = vmatpush.bf16.msra.mxu0 %v318
    %352 = vmatpush.bf16.msra.mxu0 %v316
    %353 = vmatpush.bf16.msra.mxu0 %v314
    %354 = vmatmul.bf16.gmra.mxu0 %v243
    %v355 = vpop.f32.mrf.mxu0
    %v356 = vadd.f32 %v262, %v355
    %v357 = vpop.f32.mrf.mxu0
    %358 = vdwg.mxu0
    %359 = vmatpush.bf16.msra.mxu0 %v329
    %360 = vmatpush.bf16.msra.mxu0 %v327
    %361 = vmatpush.bf16.msra.mxu0 %v325
    %362 = vmatpush.bf16.msra.mxu0 %v323
    %363 = vmatpush.bf16.msra.mxu0 %v321
    %364 = vmatpush.bf16.msra.mxu0 %v319
    %365 = vmatpush.bf16.msra.mxu0 %v317
    %366 = vmatpush.bf16.msra.mxu0 %v315
    %367 = vmatmul.bf16.gmra.mxu0 %v243
    %v368 = vpop.f32.mrf.mxu0
    %v369 = vadd.f32 %v263, %v368
    %v370 = vpop.f32.mrf.mxu0
    %371 = vdwg.mxu0
    %v372 = vld [vmem:[%s4] sm:$0x1]
    %v373 = vld [vmem:[%s5] sm:$0x1]
    %vm374 = vcmask 1041408
    %v375 = vsel %vm374, %v356, 0.0
    %376 = vadd.xlane.f32.xlu0 %v375
    %v377 = vpop.xlane.xlu0 %376
    %v378 = vrcp.pop 128.0
    %v379 = vmul.f32 128.0, %v378
    %v380 = vsub.f32 1.0, %v379
    %v381 = vmul.f32 %v378, %v380
    %v382 = vadd.f32 %v378, %v381
    %vm383 = vweird.f32 %v378
    %v384 = vsel %vm383, %v378, %v382
    %v385 = vmul.f32 %v377, %v384
    %v386 = vsub.f32 %v356, %v385
    %v387 = vmul.f32 %v386, %v386
    %v388 = vsel %vm374, %v387, 0.0
    %389 = vadd.xlane.f32.xlu0 %v388
    %v390 = vpop.xlane.xlu0 %389
    %v391 = vmul.f32 %v390, %v384
    %v392 = vadd.f32 %v391, 1e-05
    %v393 = vrsqrt.pop %v392
    %v394 = vmul.f32 %v393, %v392
    %v395 = vmul.f32 %v394, %v393
    %v396 = vmul.f32 0.5, %v395
    %v397 = vsub.f32 1.5, %v396
    %v398 = vmul.f32 %v393, %v397
    %vm399 = vweird.f32 %v392
    %vm400 = vweird.f32 %v393
    %vm401 = vmor %vm399, %vm400
    %v402 = vsel %vm401, %v393, %v398
    %v403 = vmul.f32 %v386, %v402
    %v405 = vperm.slane %v372, 0
    %v407 = vmul.f32 %v403, %v405
    %v409 = vperm.slane %v373, 0
    %v411 = vadd.f32 %v407, %v409
    %v412 = vmul.f32 %v411, %v411
    %v413 = vsel %vm374, %v412, 0.0
    %414 = vadd.xlane.f32.xlu0 %v413
    %v415 = vpop.xlane.xlu0 %414
    %v416 = vmax.f32 %v415, 1e-24
    %v417 = vrsqrt.pop %v416
    %v418 = vmul.f32 %v417, %v416
    %v419 = vmul.f32 %v418, %v417
    %v420 = vmul.f32 0.5, %v419
    %v421 = vsub.f32 1.5, %v420
    %v422 = vmul.f32 %v417, %v421
    %vm423 = vweird.f32 %v416
    %vm424 = vweird.f32 %v417
    %vm425 = vmor %vm423, %vm424
    %v426 = vsel %vm425, %v417, %v422
    %v427 = vmul.f32 %v411, %v426
    %428 = vst [vmem:[#allocation5] sm:$0x3] %v427
    %v429 = vmul.f32 %v369, 0.5
    %v430 = vmul.f32 %v369, 0.70710677
    %v431 = vmul.f32 %v430, %v430
    %v432 = vmin.f32 16.0, %v431
    %v433 = vmul.f32 %v432, 2.1237322e-06
    %v434 = vadd.f32 %v433, 0.00028619796
    %v435 = vmul.f32 %v432, %v434
    %v436 = vadd.f32 %v435, 0.0036580483
    %v437 = vmul.f32 %v432, %v436
    %v438 = vadd.f32 %v437, 0.05243302
    %v439 = vmul.f32 %v432, %v438
    %v440 = vadd.f32 %v439, 0.18741608
    %v441 = vmul.f32 %v432, %v440
    %v442 = vadd.f32 %v441, 1.1283791
    %v443 = vmul.f32 %v430, %v442
    %v444 = vmul.f32 %v432, 3.8918573e-05
    %v445 = vadd.f32 %v444, 0.001143296
    %v446 = vmul.f32 %v432, %v445
    %v447 = vadd.f32 %v446, 0.014752088
    %v448 = vmul.f32 %v432, %v447
    %v449 = vadd.f32 %v448, 0.112945676
    %v450 = vmul.f32 %v432, %v449
    %v451 = vadd.f32 %v450, 0.4994258
    %v452 = vmul.f32 %v432, %v451
    %v453 = vadd.f32 %v452, 1.0
    %v454 = vrcp.pop %v453
    %v455 = vmul.f32 %v453, %v454
    %v456 = vsub.f32 1.0, %v455
    %v457 = vmul.f32 %v454, %v456
    %v458 = vadd.f32 %v454, %v457
    %vm459 = vweird.f32 %v453
    %vm460 = vweird.f32 %v454
    %vm461 = vmor %vm459, %vm460
    %v462 = vsel %vm461, %v454, %v458
    %v463 = vand.u32 2147483647, %v453
    %vm464 = vcmp.eq.f32.partialorder %v463, 8.507059e+37
    %v465 = vand.u32 %v453, 2147483648
    %v466 = vor.u32 1.1754944e-38, %v465
    %v467 = vsel %vm464, %v466, %v462
    %v468 = vmul.f32 %v443, %v467
    %v469 = vmin.f32 %v468, 1.0
    %v470 = vmax.f32 %v469, -1.0
    %v471 = vadd.f32 %v470, 1.0
    %v472 = vmul.f32 %v429, %v471
    %v473 = vld [vmem:[%s6] sm:$0x1]
    %v474 = vld [vmem:[%s7] sm:$0x1]
    %vm475 = vcmask 1047554
    %v476 = vsel %vm475, %v472, 0.0
    %477 = vadd.xlane.f32.xlu0 %v476
    %v478 = vpop.xlane.xlu0 %477
    %v479 = vmul.f32 %v478, %v384
    %v480 = vsub.f32 %v472, %v479
    %v481 = vmul.f32 %v480, %v480
    %v482 = vsel %vm475, %v481, 0.0
    %483 = vadd.xlane.f32.xlu0 %v482
    %v484 = vpop.xlane.xlu0 %483
    %v485 = vmul.f32 %v484, %v384
    %v486 = vadd.f32 %v485, 1e-12
    %v487 = vrsqrt.pop %v486
    %v488 = vmul.f32 %v487, %v486
    %v489 = vmul.f32 %v488, %v487
    %v490 = vmul.f32 0.5, %v489
    %v491 = vsub.f32 1.5, %v490
    %v492 = vmul.f32 %v487, %v491
    %vm493 = vweird.f32 %v486
    %vm494 = vweird.f32 %v487
    %vm495 = vmor %vm493, %vm494
    %v496 = vsel %vm495, %v487, %v492
    %v497 = vmul.f32 %v480, %v496
    %v499 = vperm.slane %v473, 0
    %v501 = vmul.f32 %v497, %v499
    %v503 = vperm.slane %v474, 0
    %v505 = vadd.f32 %v501, %v503
    %v506 = vld [vmem:[%s8] sm:$0x1]
    %v508 = vperm.slane %v506, 0
    %v510 = vmul.f32 %v505, %v508
    %v511 = vsel %vm475, %v510, 0.0
    %512 = vadd.xlane.f32.xlu0 %v511
    %v513 = vpop.xlane.xlu0 %512
    %v515 = vrot.slane %v60, 6
    %v517 = vmul.f32 %v513, %v515
    %s518 = sld [smem:[#allocation4]]
    %v519 = vstv %s518
    %v521 = vrot.slane %v517, 2
    %vm522 = vcmask 48128
    %v524 = vsel %vm522, %v67, 0
    %vm526 = vcmask 1045504
    %v527 = vsel %vm526, %v521, 0
    %529 = vmatpush.msra.mxu0 0.0
    %530 = vmatpush.msra.mxu0 0.0
    %531 = vmatpush.msra.mxu0 0.0
    %532 = vmatpush.msra.mxu0 0.0
    %533 = vmatpush.msra.mxu0 0.0
    %534 = vmatpush.msra.mxu0 0.0
    %535 = vmatpush.msra.mxu0 0.0
    %536 = vmatpush.msra.mxu0 0.0
    %537 = vmatpush.msra.mxu0 0.0
    %538 = vmatpush.msra.mxu0 0.0
    %539 = vmatpush.msra.mxu0 0.0
    %540 = vmatpush.msra.mxu0 0.0
    %541 = vmatpush.msra.mxu0 0.0
    %542 = vmatpush.msra.mxu0 0.0
    %543 = vmatpush.msra.mxu0 0.0
    %544 = vmatpush.msra.mxu0 %v527
    %545 = vmatmul.f32.gmra.mxu0 %v524
    %v546 = vpop.f32.mrf.mxu0
    %v547 = vadd.f32 %v519, %v546
    %548 = vdwg.mxu0
    %v549 = vsel %vm189, %v547, nan
    %vm550 = vcmask 17408
    %551 = vst.msk [vmem:[#allocation7] sm:$0x3] %vm550, %v549
    // Predicated region
    $region38: #{dense_dqr_forward.1} parent=1 // pred_check
      _
    $region39: #{dense_dqr_forward.1} parent=1 // pred_check_branch
      %553 = sbr.rel (0) target = $region41
    $region40: #{dense_dqr_forward.1} parent=1 // pred_region
      %555 = vsyncadd [#allocation6], 0
      %s557 = sshll.u32 [#allocation5], 4
      %s558 = int_to_ptr.vmem [resolvable:$true] %s557
      %s559 = sshll.u32 %s10, 4
      %s560 = int_to_ptr.hbm [resolvable:$true] %s559
      %562 = dma.vmem_to_hbm [thread:$0]  %s558, 32, %s560, [#allocation6]
    $region41: #{dense_dqr_forward.1} parent=1 // pred_fallthru
      _
    // Predicated region
    $region42: #{dense_dqr_forward.1} parent=1 // pred_check
      _
    $region43: #{dense_dqr_forward.1} parent=1 // pred_check_branch
      %564 = sbr.rel (0) target = $region45
    $region44: #{dense_dqr_forward.1} parent=1 // pred_region
      %566 = vsyncadd [#allocation8], 0
      %s568 = sshll.u32 [#allocation7], 4
      %s569 = int_to_ptr.vmem [resolvable:$true] %s568
      %s570 = sshll.u32 %s11, 4
      %s571 = int_to_ptr.hbm [resolvable:$true] %s570
      %573 = dma.vmem_to_hbm [thread:$0]  %s569, 32, %s571, [#allocation8]
    $region45: #{dense_dqr_forward.1} parent=1 // pred_fallthru
      _
    // Predicated region
    $region46: #{dense_dqr_forward.1} parent=1 // pred_check
      _
    $region47: #{dense_dqr_forward.1} parent=1 // pred_check_branch
      %575 = sbr.rel (0) target = $region49
    $region48: #{dense_dqr_forward.1} parent=1 // pred_region
      %577 = dma.done [#allocation6], 32
    $region49: #{dense_dqr_forward.1} parent=1 // pred_fallthru
      _
    // Predicated region
    $region50: #{dense_dqr_forward.1} parent=1 // pred_check
      _
    $region51: #{dense_dqr_forward.1} parent=1 // pred_check_branch
      %579 = sbr.rel (0) target = $region53
    $region52: #{dense_dqr_forward.1} parent=1 // pred_region
      %581 = dma.done [#allocation8], 32
    $region53: #{dense_dqr_forward.1} parent=1 // pred_fallthru
      _
    %582 = vsyncpa [#allocation6], 1
    %583 = vsyncpa [#allocation8], 1

</llo_original>
